<compile_context>
chip_gen: v7x
topology: tpu7x:2x2x1
jax: 0.10.0
libtpu: 0.0.40
codegen_flags: <defaults>
</compile_context>

<pallas_src>
import jax
import jax.numpy as jnp
from jax.experimental import pallas as pl
from jax.experimental.pallas import tpu as pltpu


def _round_up(x, m):
    return (x + m - 1) // m * m


def _pick_mxu_dtype():
    """bf16 MXU inputs (f32 accumulate) on v6e/v7x; plain f32 on v5e/older."""
    try:
        dk = jax.devices()[0].device_kind.lower()
    except Exception:
        dk = ""
    return jnp.bfloat16 if any(t in dk for t in ("v6", "v7", "7x")) else jnp.float32


def conv_matmul_kernel(p_ref, w_ref, o_ref):
    # Single clean MXU pass, f32 accumulate.  The module's `v1 - 0` is an
    # identity and the output is already f32, so no extra VPU pass is emitted.
    o_ref[...] = jnp.dot(p_ref[...], w_ref[...],
                         preferred_element_type=jnp.float32)


def _im2col_nhwc(x_nhwc, KH, KW, stride, k_pad):
    """x_nhwc: (N, H, W, C) -> patches (N*OH*OW, k_pad) with K-order (kh, kw, c).

    The patch tensor is produced by a straight concatenate + reshape (the tiny
    weight is reordered instead of the activation), and the zero-pad of K up to
    a lane-aligned k_pad is folded into the same concatenate.
    """
    # TODO(synk): at larger shapes, move this window extraction in-kernel
    # (manual DMA gather from HBM) to avoid the HBM round trip of `patches`.
    N, H, W, C = x_nhwc.shape
    OH = (H - KH) // stride + 1
    OW = (W - KW) // stride + 1
    cols = []
    for kh in range(KH):
        for kw in range(KW):
            cols.append(
                x_nhwc[:, kh:kh + stride * (OH - 1) + 1:stride,
                          kw:kw + stride * (OW - 1) + 1:stride, :])  # (N,OH,OW,C)
    K = KH * KW * C
    if k_pad > K:
        cols.append(jnp.zeros((N, OH, OW, k_pad - K), x_nhwc.dtype))
    patches = jnp.concatenate(cols, axis=-1)             # (N, OH, OW, k_pad)
    return patches.reshape(N * OH * OW, k_pad), OH, OW


def model_forward(x, weight, stride=3):
    """Pallas implementation of Model.forward.

    x:      (N, IC, H, W)   float32 (NCHW, PyTorch layout)
    weight: (OC, IC, KH, KW) float32
    returns (N, OC, OH, OW)  float32 (NCHW)
    """
    N, C, H, W = x.shape
    OC, IC, KH, KW = weight.shape
    assert C == IC

    K = IC * KH * KW
    k_pad = _round_up(max(K, 128), 128)          # lane-aligned contraction dim
    mxu_dtype = _pick_mxu_dtype()

    # One small NHWC transpose of x instead of a 5-D transpose of patches.
    x_nhwc = jnp.transpose(x, (0, 2, 3, 1)).astype(mxu_dtype)
    patches, OH, OW = _im2col_nhwc(x_nhwc, KH, KW, stride, k_pad)
    M = patches.shape[0]

    # Weight-side K reorder to (kh, kw, ic) + zero-pad rows to k_pad (tiny, one-off).
    wmat = jnp.transpose(weight, (0, 2, 3, 1)).reshape(OC, K).T      # (K, OC)
    wmat = jnp.pad(wmat, ((0, k_pad - K), (0, 0))).astype(mxu_dtype)

    # Tile M so large shapes pipeline and shard across TensorCores; at M=32
    # this degenerates to a single full block.
    tm = min(256, _round_up(M, 8))
    m_pad = _round_up(M, tm)
    if m_pad != M:
        patches = jnp.pad(patches, ((0, m_pad - M), (0, 0)))

    out = pl.pallas_call(
        conv_matmul_kernel,
        out_shape=jax.ShapeDtypeStruct((m_pad, OC), jnp.float32),
        grid=(m_pad // tm,),
        in_specs=[
            pl.BlockSpec((tm, k_pad), lambda i: (i, 0)),
            pl.BlockSpec((k_pad, OC), lambda i: (0, 0)),
        ],
        out_specs=pl.BlockSpec((tm, OC), lambda i: (i, 0)),
        compiler_params=pltpu.CompilerParams(
            dimension_semantics=("parallel",)),
    )(patches, wmat)

    # (M, OC) -> NCHW to match the PyTorch module's output layout.
    return out[:M].reshape(N, OH, OW, OC).transpose(0, 3, 1, 2)


if __name__ == "__main__":
    key = jax.random.PRNGKey(0)
    k_x, k_w = jax.random.split(key)

    # Small shapes consistent with the module (Conv2d expects 4 input channels).
    N, IC, H, W = 2, 4, 16, 16
    OC, KH, KW, stride = 64, 5, 5, 3

    x = jax.random.normal(k_x, (N, IC, H, W), dtype=jnp.float32)
    # PyTorch-like init: U(-sqrt(k), sqrt(k)), k = 1/(IC*KH*KW)
    bound = (1.0 / (IC * KH * KW)) ** 0.5
    weight = jax.random.uniform(
        k_w, (OC, IC, KH, KW), dtype=jnp.float32, minval=-bound, maxval=bound)

    fwd = jax.jit(lambda a, b: model_forward(a, b, stride=stride))
    y = fwd(x, weight)
    jax.block_until_ready(y)

    # Reference: XLA conv on identically-rounded inputs (the bf16 cast is a
    # no-op on the f32 path), f32 math — isolates kernel correctness.
    mxu_dtype = _pick_mxu_dtype()
    xr = x.astype(mxu_dtype).astype(jnp.float32)
    wr = weight.astype(mxu_dtype).astype(jnp.float32)
    ref = jax.lax.conv_general_dilated(
        xr, wr, window_strides=(stride, stride), padding="VALID",
        dimension_numbers=("NCHW", "OIHW", "NCHW")) - 0.0

    OHr = (H - KH) // stride + 1
    OWr = (W - KW) // stride + 1
    assert y.shape == (N, OC, OHr, OWr)
    assert jnp.allclose(y, ref, atol=1e-3, rtol=1e-3), float(jnp.max(jnp.abs(y - ref)))

    print("KERNEL_OK")
</pallas_src>

<mosaic_0001>
module attributes {stable_mosaic.version = 11 : i64} {
  func.func @conv_matmul_kernel(%arg0: i32, %arg1: memref<32x128xf32, #tpu.memory_space<vmem>>, %arg2: memref<128x64xf32, #tpu.memory_space<vmem>>, %arg3: memref<32x64xf32, #tpu.memory_space<vmem>>) attributes {dimension_semantics = [#tpu.dimension_semantics<parallel>], iteration_bounds = array<i64: 1>, scalar_prefetch = 0 : i64, scratch_operands = 0 : i64, tpu.core_type = #tpu.core_type<tc>, window_params = [{transform_indices = @transform_0, window_bounds = array<i64: 32, 128>}, {pipeline_mode = #tpu.pipeline_mode<synchronous>, transform_indices = @transform_1, window_bounds = array<i64: 128, 64>}, {transform_indices = @transform_2, window_bounds = array<i64: 32, 64>}]} {
    %c0 = arith.constant 0 : index
    %c0_0 = arith.constant 0 : index
    %0 = vector.load %arg1[%c0, %c0_0] : memref<32x128xf32, #tpu.memory_space<vmem>>, vector<32x128xf32>
    %c0_1 = arith.constant 0 : index
    %c0_2 = arith.constant 0 : index
    %1 = vector.load %arg2[%c0_1, %c0_2] : memref<128x64xf32, #tpu.memory_space<vmem>>, vector<128x64xf32>
    %cst = arith.constant dense<0.000000e+00> : vector<32x64xf32>
    %2 = tpu.matmul %0, %1, %cst {dimension_numbers = #tpu.dot_dimension_numbers<[1], [0], [0], [1], [0, 0, 1, 1], [], []>} : vector<32x128xf32>, vector<128x64xf32>, vector<32x64xf32> -> vector<32x64xf32>
    %c0_3 = arith.constant 0 : index
    %c0_4 = arith.constant 0 : index
    %3 = vector.load %arg3[%c0_3, %c0_4] : memref<32x64xf32, #tpu.memory_space<vmem>>, vector<32x64xf32>
    tpu.vector_store %arg3[%c0_3, %c0_4], %2 {strides = array<i32>} : memref<32x64xf32, #tpu.memory_space<vmem>>, vector<32x64xf32>,
    return
  }
  func.func @transform_0(%arg0: i32) -> (i32, i32) {
    %c0_i32 = arith.constant 0 : i32
    %c0_i32_0 = arith.constant 0 : i32
    return %arg0, %c0_i32 : i32, i32
  }
  func.func @transform_1(%arg0: i32) -> (i32, i32) {
    %c0_i32 = arith.constant 0 : i32
    %c0_i32_0 = arith.constant 0 : i32
    %c0_i32_1 = arith.constant 0 : i32
    return %c0_i32, %c0_i32_0 : i32, i32
  }
  func.func @transform_2(%arg0: i32) -> (i32, i32) {
    %c0_i32 = arith.constant 0 : i32
    %c0_i32_0 = arith.constant 0 : i32
    return %arg0, %c0_i32 : i32, i32
  }
}

</mosaic_0001>

<llo_original>
// kernel: _lambda_.1
$region0: #{_lambda_.1}
  #allocation0 [shape = 'u32[]', space=smem, size = 0x4, offset = 0x4, fixed_abs, tag = 'smem constant byte address 0x4 - core index']
  #allocation1 [shape = 'u32[144,128]{1,0:T(1,128)}', space=vmem, size = 0x12000, scoped, tag = 'internal scratch']
  %s0 = inlined_call_operand.vmem [shape: f32[32,128], index: 0, kind: input, shape index: {}]
  %s1 = inlined_call_operand.vmem [shape: f32[128,64], index: 1, kind: input, shape index: {}]
  %s2 = inlined_call_operand.hbm [shape: f32[32,64], index: 2, kind: output, shape index: {}]
  %s3 = sld [smem:[#allocation0]]
  $region18: #{_lambda_.1} parent=0
    _
  %s5 = ssub.s32 1, %s3
  %s6 = scalar_select 0, %s5, %s3
  $region1: #{_lambda_.1} parent=0
    #allocation2 [shape = 'u8[16384]{0}', space=vmem, size = 0x4000, scoped, tag = 'output window, operand 0, single buffered']
    #allocation3 [shape = 's32[1]{0}', space=sflag, size = 0x4, scoped, tag = 'scoped memory for _lambda_.1']
    %7 = vsyncpa [#allocation3], 0
    // Predicated region
    $region2: #{_lambda_.1} parent=1 // pred_check
      _
    $region3: #{_lambda_.1} parent=1 // pred_check_branch
      %9 = sbr.rel (0) target = $region5
    $region4: #{_lambda_.1} parent=1 // pred_region
      _
    $region5: #{_lambda_.1} parent=1 // pred_fallthru
      _
    // Predicated region
    $region6: #{_lambda_.1} parent=1 // pred_check
      _
    $region7: #{_lambda_.1} parent=1 // pred_check_branch
      %11 = sbr.rel (0) target = $region9
    $region8: #{_lambda_.1} parent=1 // pred_region
      _
    $region9: #{_lambda_.1} parent=1 // pred_fallthru
      _
    %v12 = vld [vmem:[%s0] sm:$0xff]
    %v13 = vld [vmem:[%s0 + $0x8] sm:$0xff]
    %v14 = vld [vmem:[%s0 + $0x10] sm:$0xff]
    %v15 = vld [vmem:[%s0 + $0x18] sm:$0xff]
    %v16 = vld [vmem:[%s1] sm:$0xff]
    %v17 = vld [vmem:[%s1 + $0x8] sm:$0xff]
    %v18 = vld [vmem:[%s1 + $0x10] sm:$0xff]
    %v19 = vld [vmem:[%s1 + $0x18] sm:$0xff]
    %v20 = vld [vmem:[%s1 + $0x20] sm:$0xff]
    %v21 = vld [vmem:[%s1 + $0x28] sm:$0xff]
    %v22 = vld [vmem:[%s1 + $0x30] sm:$0xff]
    %v23 = vld [vmem:[%s1 + $0x38] sm:$0xff]
    %v24 = vld [vmem:[%s1 + $0x40] sm:$0xff]
    %v25 = vld [vmem:[%s1 + $0x48] sm:$0xff]
    %v26 = vld [vmem:[%s1 + $0x50] sm:$0xff]
    %v27 = vld [vmem:[%s1 + $0x58] sm:$0xff]
    %v28 = vld [vmem:[%s1 + $0x60] sm:$0xff]
    %v29 = vld [vmem:[%s1 + $0x68] sm:$0xff]
    %v30 = vld [vmem:[%s1 + $0x70] sm:$0xff]
    %v31 = vld [vmem:[%s1 + $0x78] sm:$0xff]
    %32 = vmatprep.subr.mxu0 0.0
    %33 = vmatpush1.msra.mxu0 %v16
    %34 = vmatprep.subr.mxu0 0.0
    %35 = vmatpush1.msra.mxu0 %v17
    %36 = vmatprep.subr.mxu0 0.0
    %37 = vmatpush1.msra.mxu0 %v18
    %38 = vmatprep.subr.mxu0 0.0
    %39 = vmatpush1.msra.mxu0 %v19
    %40 = vmatprep.subr.mxu0 0.0
    %41 = vmatpush1.msra.mxu0 %v20
    %42 = vmatprep.subr.mxu0 0.0
    %43 = vmatpush1.msra.mxu0 %v21
    %44 = vmatprep.subr.mxu0 0.0
    %45 = vmatpush1.msra.mxu0 %v22
    %46 = vmatprep.subr.mxu0 0.0
    %47 = vmatpush1.msra.mxu0 %v23
    %48 = vmatprep.subr.mxu0 0.0
    %49 = vmatpush1.msra.mxu0 %v24
    %50 = vmatprep.subr.mxu0 0.0
    %51 = vmatpush1.msra.mxu0 %v25
    %52 = vmatprep.subr.mxu0 0.0
    %53 = vmatpush1.msra.mxu0 %v26
    %54 = vmatprep.subr.mxu0 0.0
    %55 = vmatpush1.msra.mxu0 %v27
    %56 = vmatprep.subr.mxu0 0.0
    %57 = vmatpush1.msra.mxu0 %v28
    %58 = vmatprep.subr.mxu0 0.0
    %59 = vmatpush1.msra.mxu0 %v29
    %60 = vmatprep.subr.mxu0 0.0
    %61 = vmatpush1.msra.mxu0 %v30
    %62 = vmatprep.subr.mxu0 0.0
    %63 = vmatpush1.msra.mxu0 %v31
    %64 = vmatprep.subr.mxu0 0.0
    %65 = vmatpush1.msra.mxu0 0.0
    %66 = vmatprep.subr.mxu0 0.0
    %67 = vmatpush1.msra.mxu0 0.0
    %68 = vmatprep.subr.mxu0 0.0
    %69 = vmatpush1.msra.mxu0 0.0
    %70 = vmatprep.subr.mxu0 0.0
    %71 = vmatpush1.msra.mxu0 0.0
    %72 = vmatprep.subr.mxu0 0.0
    %73 = vmatpush1.msra.mxu0 0.0
    %74 = vmatprep.subr.mxu0 0.0
    %75 = vmatpush1.msra.mxu0 0.0
    %76 = vmatprep.subr.mxu0 0.0
    %77 = vmatpush1.msra.mxu0 0.0
    %78 = vmatprep.subr.mxu0 0.0
    %79 = vmatpush1.msra.mxu0 0.0
    %80 = vmatprep.subr.mxu0 0.0
    %81 = vmatpush1.msra.mxu0 0.0
    %82 = vmatprep.subr.mxu0 0.0
    %83 = vmatpush1.msra.mxu0 0.0
    %84 = vmatprep.subr.mxu0 0.0
    %85 = vmatpush1.msra.mxu0 0.0
    %86 = vmatprep.subr.mxu0 0.0
    %87 = vmatpush1.msra.mxu0 0.0
    %88 = vmatprep.subr.mxu0 0.0
    %89 = vmatpush1.msra.mxu0 0.0
    %90 = vmatprep.subr.mxu0 0.0
    %91 = vmatpush1.msra.mxu0 0.0
    %92 = vmatprep.subr.mxu0 0.0
    %93 = vmatpush1.msra.mxu0 0.0
    %94 = vmatprep.subr.mxu0 0.0
    %95 = vmatpush1.msra.mxu0 0.0
    %96 = vmatprep.mubr.f32.mxu0 0.0
    %97 = vmatmul.mubr.f32.gmra.mrb[0].mxu0 %v12
    %v98 = vpop.f32.mrb[0].mxu0
    %v99 = vadd.f32 0.0, %v98
    %v100 = vpop.f32.mrb[0].mxu0
    %101 = vmatprep.mubr.f32.mxu0 0.0
    %102 = vmatmul.mubr.f32.gmra.mrb[0].mxu0 %v13
    %v103 = vpop.f32.mrb[0].mxu0
    %v104 = vadd.f32 0.0, %v103
    %v105 = vpop.f32.mrb[0].mxu0
    %106 = vmatprep.mubr.f32.mxu0 0.0
    %107 = vmatmul.mubr.f32.gmra.mrb[0].mxu0 %v14
    %v108 = vpop.f32.mrb[0].mxu0
    %v109 = vadd.f32 0.0, %v108
    %v110 = vpop.f32.mrb[0].mxu0
    %111 = vmatprep.mubr.f32.mxu0 0.0
    %112 = vmatmul.mubr.f32.gmra.mrb[0].mxu0 %v15
    %v113 = vpop.f32.mrb[0].mxu0
    %v114 = vadd.f32 0.0, %v113
    %v115 = vpop.f32.mrb[0].mxu0
    %116 = vdwg.mxu0
    %vm117 = vcmask 523264
    %118 = vst.msk [vmem:[#allocation2] sm:$0xff] %vm117, %v99
    %119 = vst.msk [vmem:[#allocation2 + $0x8] sm:$0xff] %vm117, %v104
    %120 = vst.msk [vmem:[#allocation2 + $0x10] sm:$0xff] %vm117, %v109
    %121 = vst.msk [vmem:[#allocation2 + $0x18] sm:$0xff] %vm117, %v114
    // Predicated region
    $region10: #{_lambda_.1} parent=1 // pred_check
      _
    $region11: #{_lambda_.1} parent=1 // pred_check_branch
      %123 = sbr.rel (0) target = $region13
    $region12: #{_lambda_.1} parent=1 // pred_region
      %s125 = ssub.s32 512, 512
      %126 = vsyncadd [#allocation3], %s125
      %s127 = sshll.u32 [#allocation2], 4
      %s128 = int_to_ptr.vmem [resolvable:$true] %s127
      %133 = dma.vmem_to_hbm [thread:$0]  %s128, 512, %s2, [#allocation3], 128, 128, 8
    $region13: #{_lambda_.1} parent=1 // pred_fallthru
      _
    // Predicated region
    $region14: #{_lambda_.1} parent=1 // pred_check
      _
    $region15: #{_lambda_.1} parent=1 // pred_check_branch
      %135 = sbr.rel (0) target = $region17
    $region16: #{_lambda_.1} parent=1 // pred_region
      %136 = dma.done [#allocation3], 512
    $region17: #{_lambda_.1} parent=1 // pred_fallthru
      _
    %137 = vsyncpa [#allocation3], 1

</llo_original>
